<compile_context>
chip_gen: v6e
topology: v6e:2x2x1
jax: 0.10.0
libtpu: 0.0.40
codegen_flags: <defaults>
</compile_context>

<pallas_src>
import jax
import jax.numpy as jnp
from jax.experimental import pallas as pl
from jax.experimental.pallas import tpu as pltpu


# ------------------------------------------------------------------ small helpers
def _round_up(v, m):
    return -(-v // m) * m


def _divisors(n):
    return [d for d in range(1, n + 1) if n % d == 0]


# ------------------------------------------------------------------------- kernel
def _make_kernel(compute_dtype):
    def sym_spatial_kernel(w_ref, x_ref, o_ref):
        # w_ref: (3*O, K) resident weight; x_ref: (b_blk, K, Wt); o_ref: (b_blk, 3*O, Wt)
        w = w_ref[...]
        b_blk = x_ref.shape[0]

        def one(b):
            xb = x_ref[b]
            if xb.dtype != compute_dtype:
                xb = xb.astype(compute_dtype)          # in-kernel cast (VPU, hidden)
            o_ref[b] = jnp.dot(
                w, xb, preferred_element_type=jnp.float32
            ).astype(o_ref.dtype)

        if b_blk <= 8:
            # small static fold -> full unroll, LLO sees everything
            for b in range(b_blk):
                one(b)
        else:
            # large fold -> bounded live ranges / regalloc, modest unroll
            def body(b, carry):
                one(b)
                return carry

            jax.lax.fori_loop(0, b_blk, body, 0, unroll=4)

    return sym_spatial_kernel


# ------------------------------------------------------------------- weight build
def build_combined_weight(w_conv, w_lr, n_channels, n_center_channels):
    """Scatter the two conv weights into one (3*O, C*H) matmul weight.

    Rows are (O, 3)-interleaved so the kernel output reshapes straight to
    (N, O, 3, W) without a transpose.
    """
    O, C = w_conv.shape[0], w_conv.shape[1]
    n_lr = (n_channels - n_center_channels) // 2

    # self.conv: kernel covers the whole electrode axis.
    w_full = w_conv[..., 0].reshape(O, C * n_channels)

    # self.lr_conv, left window: electrode rows [0, n_lr)
    w_left = jnp.zeros((O, C, n_channels), w_lr.dtype)
    w_left = w_left.at[:, :, :n_lr].set(w_lr[..., 0])

    # self.lr_conv, right window: electrode rows [n_lr + n_center, n_channels)
    w_right = jnp.zeros((O, C, n_channels), w_lr.dtype)
    w_right = w_right.at[:, :, n_lr + n_center_channels:].set(w_lr[..., 0])

    # (O, 3, C*H) -> (3*O, C*H): row 3*o + {0:conv, 1:left, 2:right}
    return jnp.stack(
        [w_full, w_left.reshape(O, -1), w_right.reshape(O, -1)], axis=1
    ).reshape(3 * O, C * n_channels)


# ------------------------------------------------------------------------- tiling
def _vmem_budget_bytes():
    """Per-generation scoped-VMEM budget with headroom for Mosaic scratch.

    v5e/v6e (128 MiB physical) -> 96 MiB; v7x (64 MiB physical) -> 48 MiB."""
    try:
        cap = int(pltpu.get_tpu_info().vmem_capacity_bytes)
    except Exception:
        cap = 64 * 1024 * 1024  # conservative fallback
    return max(16 << 20, min(3 * cap // 4, 96 << 20))


def _choose_tiles(N, K, O3, Wp, in_itemsize, out_itemsize, budget):
    """Pick (batch fold b_blk, time tile w_tile) for grid (N//b_blk, Wp//w_tile).

    Targets ~6 MiB of streamed input+output bytes per grid step (amortizing the
    ~0.35 us / ~600 cycle per-step pipeline overhead), growing the lane tile first
    (longer contiguous HBM runs, fewer DMA descriptors) and then folding batches.
    The double-buffered VMEM footprint is capped at ~24-28 MiB (safe on v7x's
    smaller VMEM) and the grid is kept at >= 2 programs when possible so both v7x
    TensorCores can be used and the pipeline can overlap.
    """
    TARGET = 6 << 20                                   # ~6 MiB streamed per step
    vmem_cap = min(budget // 2, 28 << 20)              # tile budget (double-buffered)

    sub_in = max(8, 32 // in_itemsize)                 # sublane packing granularity
    sub_out = max(8, 32 // out_itemsize)
    k_pad = _round_up(K, sub_in)
    o_pad = _round_up(O3, sub_out)
    # resident weight (double-buffered, lane-padded) -- tiny but counted
    w_vmem = 2 * _round_up(O3, sub_in) * _round_up(K, 128) * in_itemsize

    def io_bytes(b, wt):            # streamed HBM bytes per grid step
        return b * wt * (K * in_itemsize + O3 * out_itemsize)

    def vmem_bytes(b, wt):          # double-buffered VMEM footprint per step
        return 2 * b * wt * (k_pad * in_itemsize + o_pad * out_itemsize) + w_vmem

    lane_opts = [128 * d for d in _divisors(Wp // 128)]   # ascending, all divide Wp
    b_opts = _divisors(N)                                  # ascending, all divide N

    # 1) grow the lane tile up to the byte target (longest contiguous runs first).
    w_tile = lane_opts[0]
    for wt in lane_opts:
        if vmem_bytes(1, wt) <= vmem_cap and io_bytes(1, wt) <= TARGET:
            w_tile = wt
    if vmem_bytes(1, w_tile) > vmem_cap:               # pathological K: shrink to fit
        for wt in lane_opts:
            if vmem_bytes(1, wt) <= vmem_cap:
                w_tile = wt
                break

    # 2) fold batches (unconditionally) until the step reaches the target.
    b_blk = 1
    for b in b_opts:
        if vmem_bytes(b, w_tile) <= vmem_cap:
            b_blk = b
            if io_bytes(b, w_tile) >= TARGET:
                break

    # 3) keep >= 2 grid programs when the problem allows it (v7x megacore /
    #    pipeline overlap); shrink the batch fold first, then the lane tile.
    def n_programs(b, wt):
        return (N // b) * (Wp // wt)

    while n_programs(b_blk, w_tile) < 2:
        if b_blk > 1:
            b_blk = max(d for d in b_opts if d < b_blk)
        elif w_tile > lane_opts[0]:
            w_tile = max(l for l in lane_opts if l < w_tile)
        else:
            break

    return b_blk, w_tile


# ------------------------------------------------------------------------ wrapper
def symmetric_spatial_block(x, w_conv, w_lr, n_channels, n_center_channels,
                            compute_dtype=jnp.bfloat16, out_dtype=None):
    """Pallas forward of SymmetricSpatialBlock.  x: NCHW, returns (N, O, 3, W).

    compute_dtype: matmul dtype (default bf16; accumulation is always f32).
                   Pass jnp.float32 (or None -> x.dtype) for the exact f32 path.
    out_dtype:     output dtype; defaults to compute_dtype (bf16 output halves the
                   store-side HBM traffic of this memory-bound kernel).
    """
    N, C, H, W = x.shape
    assert H == n_channels, "input H must equal n_channels (electrode axis)"
    O = w_conv.shape[0]
    K = C * H
    O3 = 3 * O

    compute_dtype = jnp.dtype(x.dtype if compute_dtype is None else compute_dtype)
    out_dtype = jnp.dtype(compute_dtype if out_dtype is None else out_dtype)

    # Tiny combined weight: cast once in the wrapper (stays VMEM-resident in-kernel).
    w_big = build_combined_weight(
        w_conv, w_lr, n_channels, n_center_channels).astype(compute_dtype)

    # Do NOT cast x here (an un-fused wrapper cast adds a full extra HBM pass);
    # the kernel casts each tile after the DMA.
    x_flat = x.reshape(N, K, W)

    # Pad time to a multiple of 128: lane-dense unmasked stores on every path and
    # no unchecked full-extent-W block (keeps tiles bounded by the VMEM budget).
    Wp = _round_up(W, 128)
    if Wp != W:
        x_flat = jnp.pad(x_flat, ((0, 0), (0, 0), (0, Wp - W)))

    in_itemsize = jnp.dtype(x_flat.dtype).itemsize
    out_itemsize = out_dtype.itemsize

    budget = _vmem_budget_bytes()
    b_blk, w_tile = _choose_tiles(N, K, O3, Wp, in_itemsize, out_itemsize, budget)
    grid = (N // b_blk, Wp // w_tile)

    cost = pl.CostEstimate(
        flops=int(2 * N * O3 * K * W),
        transcendentals=0,
        bytes_accessed=int(N * K * W * in_itemsize
                           + N * O3 * W * out_itemsize
                           + O3 * K * jnp.dtype(compute_dtype).itemsize),
    )

    out = pl.pallas_call(
        _make_kernel(compute_dtype),
        out_shape=jax.ShapeDtypeStruct((N, O3, Wp), out_dtype),
        grid_spec=pltpu.PrefetchScalarGridSpec(
            num_scalar_prefetch=0,
            grid=grid,
            in_specs=[
                # shared weight: constant block index -> fetched once, VMEM-resident
                pl.BlockSpec((O3, K), lambda n, t: (0, 0)),
                # per-step activation slab: b_blk batches x full K x one time tile
                pl.BlockSpec((b_blk, K, w_tile), lambda n, t: (n, 0, t)),
            ],
            out_specs=pl.BlockSpec((b_blk, O3, w_tile), lambda n, t: (n, 0, t)),
        ),
        compiler_params=pltpu.CompilerParams(
            # both axes independent -> megacore sharding on v7x (2 TCs)
            dimension_semantics=("parallel", "parallel"),
            vmem_limit_bytes=int(budget),
        ),
        cost_estimate=cost,
    )(w_big, x_flat)

    # rows are already (O, 3)-interleaved -> pure reshape, no transpose
    out = out.reshape(N, O, 3, Wp)
    if Wp != W:
        out = out[..., :W]
    return out


# ---------------------------------------------------------------------- reference
def reference_forward(x, w_conv, w_lr, n_channels, n_center_channels):
    """Pure-JAX reference of the PyTorch forward (for checking)."""
    n_lr = (n_channels - n_center_channels) // 2
    y0 = jnp.einsum("nchw,ochk->now", x, w_conv)                       # conv (full H)
    y1 = jnp.einsum("nchw,ochk->now", x[:, :, :n_lr, :], w_lr)         # lr left
    y2 = jnp.einsum(
        "nchw,ochk->now", x[:, :, n_lr + n_center_channels:, :], w_lr  # lr right
    )
    return jnp.stack([y0, y1, y2], axis=2)                             # (N, O, 3, W)


if __name__ == "__main__":
    # Small shapes consistent with the module.
    N, C_in, O = 2, 4, 8
    n_channels, n_center_channels = 6, 2        # n_lr = 2
    W_time = 16

    key = jax.random.PRNGKey(0)
    k_x, k_w1, k_w2 = jax.random.split(key, 3)

    x = jax.random.normal(k_x, (N, C_in, n_channels, W_time), dtype=jnp.float32)

    # Deterministic param init (shapes match nn.Conv2d weights, bias=False).
    n_lr = (n_channels - n_center_channels) // 2
    bound1 = 1.0 / (C_in * n_channels) ** 0.5
    bound2 = 1.0 / (C_in * n_lr) ** 0.5
    w_conv = jax.random.uniform(
        k_w1, (O, C_in, n_channels, 1), jnp.float32, -bound1, bound1)
    w_lr = jax.random.uniform(
        k_w2, (O, C_in, n_lr, 1), jnp.float32, -bound2, bound2)

    y_ref = reference_forward(x, w_conv, w_lr, n_channels, n_center_channels)

    # Exact f32 path (strict check, matches the PyTorch module numerics).
    y_f32 = symmetric_spatial_block(
        x, w_conv, w_lr, n_channels, n_center_channels, compute_dtype=jnp.float32)
    y_f32 = jax.block_until_ready(y_f32)
    assert y_f32.shape == (N, O, 3, W_time), y_f32.shape
    assert y_f32.dtype == jnp.float32
    assert jnp.allclose(y_f32, y_ref, atol=1e-4, rtol=1e-4), "mismatch vs reference (f32)"

    # Default path: bf16 compute + bf16 output (f32 accumulation) -> halves HBM traffic.
    y_bf = symmetric_spatial_block(x, w_conv, w_lr, n_channels, n_center_channels)
    y_bf = jax.block_until_ready(y_bf)
    assert y_bf.shape == (N, O, 3, W_time), y_bf.shape
    assert y_bf.dtype == jnp.bfloat16
    assert jnp.allclose(y_bf.astype(jnp.float32), y_ref, atol=5e-2, rtol=5e-2), \
        "mismatch vs reference (bf16)"

    print("KERNEL_OK")
</pallas_src>

<mosaic_0001>
module attributes {stable_mosaic.version = 11 : i64} {
  func.func @sym_spatial_kernel(%arg0: i32, %arg1: i32, %arg2: memref<24x24xf32, #tpu.memory_space<vmem>>, %arg3: memref<1x24x128xf32, #tpu.memory_space<vmem>>, %arg4: memref<1x24x128xf32, #tpu.memory_space<vmem>>) attributes {dimension_semantics = [#tpu.dimension_semantics<parallel>, #tpu.dimension_semantics<parallel>], iteration_bounds = array<i64: 2, 1>, scalar_prefetch = 0 : i64, scratch_operands = 0 : i64, tpu.core_type = #tpu.core_type<tc>, window_params = [{pipeline_mode = #tpu.pipeline_mode<synchronous>, transform_indices = @transform_0, window_bounds = array<i64: 24, 24>}, {transform_indices = @transform_1, window_bounds = array<i64: 1, 24, 128>}, {transform_indices = @transform_2, window_bounds = array<i64: 1, 24, 128>}]} {
    %c0 = arith.constant 0 : index
    %c0_0 = arith.constant 0 : index
    %0 = vector.load %arg2[%c0, %c0_0] : memref<24x24xf32, #tpu.memory_space<vmem>>, vector<24x24xf32>
    %c0_1 = arith.constant 0 : index
    %c0_2 = arith.constant 0 : index
    %c0_3 = arith.constant 0 : index
    %1 = vector.load %arg3[%c0_1, %c0_2, %c0_3] : memref<1x24x128xf32, #tpu.memory_space<vmem>>, vector<1x24x128xf32>
    %2 = vector.shape_cast %1 : vector<1x24x128xf32> to vector<24x128xf32>
    %cst = arith.constant dense<0.000000e+00> : vector<24x128xf32>
    %3 = tpu.matmul %0, %2, %cst {dimension_numbers = #tpu.dot_dimension_numbers<[1], [0], [0], [1], [0, 0, 1, 1], [], []>} : vector<24x24xf32>, vector<24x128xf32>, vector<24x128xf32> -> vector<24x128xf32>
    %c0_4 = arith.constant 0 : index
    %c0_5 = arith.constant 0 : index
    %c0_6 = arith.constant 0 : index
    %4 = vector.load %arg4[%c0_4, %c0_5, %c0_6] : memref<1x24x128xf32, #tpu.memory_space<vmem>>, vector<1x24x128xf32>
    %5 = vector.shape_cast %4 : vector<1x24x128xf32> to vector<24x128xf32>
    %6 = vector.shape_cast %3 : vector<24x128xf32> to vector<1x24x128xf32>
    tpu.vector_store %arg4[%c0_4, %c0_5, %c0_6], %6 {strides = array<i32>} : memref<1x24x128xf32, #tpu.memory_space<vmem>>, vector<1x24x128xf32>,
    return
  }
  func.func @transform_0(%arg0: i32, %arg1: i32) -> (i32, i32) {
    %c0_i32 = arith.constant 0 : i32
    %c0_i32_0 = arith.constant 0 : i32
    %c0_i32_1 = arith.constant 0 : i32
    return %c0_i32, %c0_i32_0 : i32, i32
  }
  func.func @transform_1(%arg0: i32, %arg1: i32) -> (i32, i32, i32) {
    %c0_i32 = arith.constant 0 : i32
    %c0_i32_0 = arith.constant 0 : i32
    return %arg0, %c0_i32, %arg1 : i32, i32, i32
  }
  func.func @transform_2(%arg0: i32, %arg1: i32) -> (i32, i32, i32) {
    %c0_i32 = arith.constant 0 : i32
    %c0_i32_0 = arith.constant 0 : i32
    return %arg0, %c0_i32, %arg1 : i32, i32, i32
  }
}

</mosaic_0001>

<llo_original>
// kernel: tpu_custom_call.1
$region0: #{tpu_custom_call.1}
  #allocation0 [shape = 'u32[]', space=smem, size = 0x4, offset = 0x4, fixed_abs, tag = 'smem constant byte address 0x4 - core index']
  #allocation1 [shape = 'u32[144,128]{1,0:T(1,128)}', space=vmem, size = 0x12000, scoped, tag = 'internal scratch']
  %s0 = inlined_call_operand.hbm [shape: f32[24,24], index: 0, kind: input, shape index: {}]
  %s1 = inlined_call_operand.hbm [shape: f32[2,24,128], index: 1, kind: input, shape index: {}]
  %s2 = inlined_call_operand.hbm [shape: f32[2,24,128], index: 2, kind: output, shape index: {}]
  %s3 = sld [smem:[#allocation0]]
  $region49: #{tpu_custom_call.1} parent=0
    _
  %s5 = ssub.s32 1, %s3
  %s6 = scalar_select 0, %s5, %s3
  $region1: #{tpu_custom_call.1} parent=0
    #allocation2 [shape = 'u8[12288]{0}', space=vmem, size = 0x3000, scoped, tag = 'input window, operand 0, single buffered']
    #allocation3 [shape = 's32[2]{0}', space=sflag, size = 0x8, scoped, tag = 'scoped memory for tpu_custom_call.1']
    #allocation4 [shape = 's32[2]{0}', space=sflag, size = 0x8, scoped, tag = 'scoped memory for tpu_custom_call.1']
    #allocation5 [shape = 'u8[24576]{0}', space=vmem, size = 0x6000, scoped, tag = 'input window, operand 1']
    #allocation6 [shape = 's32[2]{0}', space=sflag, size = 0x8, scoped, tag = 'scoped memory for tpu_custom_call.1']
    #allocation7 [shape = 'u8[24576]{0}', space=vmem, size = 0x6000, scoped, tag = 'output window, operand 0']
    %7 = vsyncpa [#allocation3], 0
    %8 = vsyncpa [#allocation6], 0
    %s9 = scalar_lea.sflag [#allocation6], 1
    %10 = vsyncpa %s9, 0
    %11 = vsyncpa [#allocation4], 0
    %s12 = scalar_lea.sflag [#allocation4], 1
    %13 = vsyncpa %s12, 0
    loop: start=0, step=1, limit=4
    $region2: #{tpu_custom_call.1} parent=1 // loop_pre_header
      _
    $region3: #{tpu_custom_call.1} parent=1 // loop_header
      %s15 = sphi 0, %s19
      %p16 = scmp.ge.s32.totalorder %s15, 4
      %s22 = sphi 0, %s34
      %s23 = sphi 0, %s30
      %s24 = sphi 0, %s22
      %s25 = sphi 0, %s23
      %s26 = sphi 0, %s24
      %s27 = sphi 0, %s25
      %s35 = sphi 0, %s35
      %s37 = sphi 0, %s35
      %s38 = sphi 0, %s37
      %s52 = sphi 0, %s38
      %s60 = sphi 0, %s62
      %s63 = sphi 0, %s60
      %s64 = sphi 0, %s63
      %s80 = sphi 0, %s64
      %s88 = sphi 0, %s90
      %s91 = sphi 0, %s88
      %s92 = sphi 0, %s91
      %s108 = sphi 0, %s92
    $region4: #{tpu_custom_call.1} parent=1 // loop_header_branch
      %18 = sbr.rel (%p16) target = $region8
    $region5: #{tpu_custom_call.1} parent=1 // loop_body
      %s20 = ssub.s32 %s15, 1
      %s21 = ssub.s32 %s15, 2
      %s28 = sadd.s32 1, %s23
      %p29 = scmp.ge.s32.totalorder %s28, 1
      %s30 = scalar_select %p29, 0, %s28
      %s31 = sadd.s32 1, %s22
      %s32 = scalar_select %p29, %s31, %s22
      %p33 = scmp.ge.s32.totalorder %s32, 2
      %s34 = scalar_select %p33, 0, %s32
      %s36 = sadd.s32 %s35, 1
      %p39 = scmp.eq.s32.totalorder %s15, 1
      %p40 = scmp.ne.s32.totalorder %s35, %s37
      %p41 = scmp.eq.s32.totalorder %s15, 0
      %p42 = por %p40, %p41
      %p43 = scmp.ne.s32.totalorder %s35, %s37
      %p44 = scmp.eq.s32.totalorder %s20, 1
      %p45 = por %p43, %p44
      %p46 = scmp.ne.s32.totalorder %s37, %s38
      %p47 = scmp.eq.s32.totalorder %s20, 0
      %p48 = por %p46, %p47
      %p49 = scmp.ne.s32.totalorder %s37, %s38
      %p50 = scmp.eq.s32.totalorder %s21, 1
      %p51 = por %p49, %p50
      %p53 = scmp.ne.s32.totalorder %s38, %s52
      %p54 = scmp.eq.s32.totalorder %s21, 0
      %p55 = por %p53, %p54
      %s56 = ssub.s32 %s22, %s34
      %s57 = ssub.s32 %s23, %s30
      %s58 = sor.u32 %s56, %s57
      %p59 = scmp.eq.s32.totalorder %s58, 0
      %s61 = sadd.s32 %s60, 1
      %s62 = scalar_select %p59, %s60, %s61
      %p65 = pneg %p59
      %p66 = scmp.eq.s32.totalorder %s15, 1
      %p67 = por %p65, %p66
      %p68 = scmp.ne.s32.totalorder %s60, %s63
      %p69 = scmp.eq.s32.totalorder %s15, 0
      %p70 = por %p68, %p69
      %p71 = scmp.ne.s32.totalorder %s60, %s63
      %p72 = scmp.eq.s32.totalorder %s20, 1
      %p73 = por %p71, %p72
      %p74 = scmp.ne.s32.totalorder %s63, %s64
      %p75 = scmp.eq.s32.totalorder %s20, 0
      %p76 = por %p74, %p75
      %p77 = scmp.ne.s32.totalorder %s63, %s64
      %p78 = scmp.eq.s32.totalorder %s21, 1
      %p79 = por %p77, %p78
      %p81 = scmp.ne.s32.totalorder %s64, %s80
      %p82 = scmp.eq.s32.totalorder %s21, 0
      %p83 = por %p81, %p82
      %s84 = ssub.s32 %s22, %s34
      %s85 = ssub.s32 %s23, %s30
      %s86 = sor.u32 %s84, %s85
      %p87 = scmp.eq.s32.totalorder %s86, 0
      %s89 = sadd.s32 %s88, 1
      %s90 = scalar_select %p87, %s88, %s89
      %p93 = pneg %p87
      %p94 = scmp.eq.s32.totalorder %s15, 1
      %p95 = por %p93, %p94
      %p96 = scmp.ne.s32.totalorder %s88, %s91
      %p97 = scmp.eq.s32.totalorder %s15, 0
      %p98 = por %p96, %p97
      %p99 = scmp.ne.s32.totalorder %s88, %s91
      %p100 = scmp.eq.s32.totalorder %s20, 1
      %p101 = por %p99, %p100
      %p102 = scmp.ne.s32.totalorder %s91, %s92
      %p103 = scmp.eq.s32.totalorder %s20, 0
      %p104 = por %p102, %p103
      %p105 = scmp.ne.s32.totalorder %s91, %s92
      %p106 = scmp.eq.s32.totalorder %s21, 1
      %p107 = por %p105, %p106
      %p109 = scmp.ne.s32.totalorder %s92, %s108
      %p110 = scmp.eq.s32.totalorder %s21, 0
      %p111 = por %p109, %p110
      %p112 = scmp.le.s32.totalorder 1, %s15
      %p113 = scmp.lt.s32.totalorder %s15, 3
      %p114 = pnand %p112, %p113
      %p115 = pneg %p114
      // Predicated region
      $region9: #{tpu_custom_call.1} parent=5 // pred_check
        _
      $region10: #{tpu_custom_call.1} parent=5 // pred_check_branch
        %117 = sbr.rel (%p114) target = $region12
      $region11: #{tpu_custom_call.1} parent=5 // pred_region
        %s118 = ssub.s32 %s15, 1
        // Predicated region
        $region13: #{tpu_custom_call.1} parent=11 // pred_check
          %p119 = pneg %p48
        $region14: #{tpu_custom_call.1} parent=11 // pred_check_branch
          %121 = sbr.rel (%p119) target = $region16
        $region15: #{tpu_custom_call.1} parent=11 // pred_region
          %s123 = ssub.s32 384, 384
          %124 = vsyncadd [#allocation3], %s123
          %s125 = sshll.u32 [#allocation2], 4
          %s126 = int_to_ptr.vmem [resolvable:$true] %s125
          %131 = dma.hbm_to_vmem [thread:$0]  %s0, 384, %s126, [#allocation3], 128, 128, 8
        $region16: #{tpu_custom_call.1} parent=11 // pred_fallthru
          _
      $region12: #{tpu_custom_call.1} parent=5 // pred_fallthru
        _
      %p132 = scmp.lt.s32.totalorder %s15, 2
      // Predicated region
      $region17: #{tpu_custom_call.1} parent=5 // pred_check
        %p133 = pneg %p132
      $region18: #{tpu_custom_call.1} parent=5 // pred_check_branch
        %135 = sbr.rel (%p133) target = $region20
      $region19: #{tpu_custom_call.1} parent=5 // pred_region
        // Predicated region
        $region21: #{tpu_custom_call.1} parent=19 // pred_check
          %p136 = pneg %p70
        $region22: #{tpu_custom_call.1} parent=19 // pred_check_branch
          %138 = sbr.rel (%p136) target = $region24
        $region23: #{tpu_custom_call.1} parent=19 // pred_region
          %s139 = sand.u32 %s60, 1
          %s140 = scalar_lea.sflag [#allocation6], %s139
          %s141 = sand.u32 %s60, 1
          %s142 = smul.addr %s141, 24
          %s143 = scalar_lea.vmem [#allocation5], %s142
          %s145 = ssub.s32 384, 384
          %146 = vsyncadd %s140, %s145
          %s147 = smul.addr %s22, 3
          %s148 = sadd.s32 %s23, %s147
          %s149 = smul.addr %s148, 128
          %s150 = scalar_lea.hbm %s1, %s149
          %s151 = sshll.u32 %s143, 4
          %s152 = int_to_ptr.vmem [resolvable:$true] %s151
          %157 = dma.hbm_to_vmem [thread:$0]  %s150, 384, %s152, %s140, 128, 128, 8
        $region24: #{tpu_custom_call.1} parent=19 // pred_fallthru
          _
      $region20: #{tpu_custom_call.1} parent=5 // pred_fallthru
        _
      %p158 = scmp.le.s32.totalorder 1, %s15
      %p159 = scmp.lt.s32.totalorder %s15, 3
      %p160 = pnand %p158, %p159
      %p161 = pneg %p160
      // Predicated region
      $region25: #{tpu_custom_call.1} parent=5 // pred_check
        _
      $region26: #{tpu_custom_call.1} parent=5 // pred_check_branch
        %163 = sbr.rel (%p160) target = $region28
      $region27: #{tpu_custom_call.1} parent=5 // pred_region
        %s164 = ssub.s32 %s15, 1
        // Predicated region
        $region29: #{tpu_custom_call.1} parent=27 // pred_check
          %p165 = pneg %p48
        $region30: #{tpu_custom_call.1} parent=27 // pred_check_branch
          %167 = sbr.rel (%p165) target = $region32
        $region31: #{tpu_custom_call.1} parent=27 // pred_region
          %168 = dma.done [#allocation3], 384
        $region32: #{tpu_custom_call.1} parent=27 // pred_fallthru
          _
        %s169 = sand.u32 %s63, 1
        %s170 = scalar_lea.sflag [#allocation6], %s169
        %s171 = sand.u32 %s63, 1
        %s172 = smul.addr %s171, 24
        %s173 = scalar_lea.vmem [#allocation5], %s172
        // Predicated region
        $region33: #{tpu_custom_call.1} parent=27 // pred_check
          %p174 = pneg %p76
        $region34: #{tpu_custom_call.1} parent=27 // pred_check_branch
          %176 = sbr.rel (%p174) target = $region36
        $region35: #{tpu_custom_call.1} parent=27 // pred_region
          %177 = dma.done %s170, 384
        $region36: #{tpu_custom_call.1} parent=27 // pred_fallthru
          _
        %p178 = pneg %p48
        %p179 = pneg %p45
        %s180 = sand.u32 %s63, 1
        %s181 = scalar_lea.sflag [#allocation6], %s180
        %s182 = sand.u32 %s63, 1
        %s183 = smul.addr %s182, 24
        %s184 = scalar_lea.vmem [#allocation5], %s183
        %p185 = pneg %p76
        %p186 = pneg %p73
        %p187 = pneg %p104
        %p188 = pneg %p101
        %s189 = sand.u32 %s91, 1
        %s190 = scalar_lea.sflag [#allocation4], %s189
        %s191 = sand.u32 %s91, 1
        %s192 = smul.addr %s191, 24
        %s193 = scalar_lea.vmem [#allocation7], %s192
        %v194 = vld [vmem:[#allocation2] sm:$0xff]
        %v195 = vld [vmem:[#allocation2 + $0x8] sm:$0xff]
        %v196 = vld [vmem:[#allocation2 + $0x10] sm:$0xff]
        %v197 = vld [vmem:[%s173] sm:$0xff]
        %v198 = vld [vmem:[%s173 + $0x8] sm:$0xff]
        %v199 = vld [vmem:[%s173 + $0x10] sm:$0xff]
        %vm200 = vcmask 195584
        %v202 = vsel %vm200, %v194, 0
        %v205 = vsel %vm200, %v195, 0
        %v208 = vsel %vm200, %v196, 0
        %210 = vmatprep.subr.mxu0 0.0
        %211 = vmatpush1.msra.mxu0 0.0
        %212 = vmatprep.subr.mxu0 0.0
        %213 = vmatpush1.msra.mxu0 0.0
        %214 = vmatprep.subr.mxu0 0.0
        %215 = vmatpush1.msra.mxu0 0.0
        %216 = vmatprep.subr.mxu0 0.0
        %217 = vmatpush1.msra.mxu0 0.0
        %218 = vmatprep.subr.mxu0 0.0
        %219 = vmatpush1.msra.mxu0 0.0
        %220 = vmatprep.subr.mxu0 0.0
        %221 = vmatpush1.msra.mxu0 0.0
        %222 = vmatprep.subr.mxu0 0.0
        %223 = vmatpush1.msra.mxu0 0.0
        %224 = vmatprep.subr.mxu0 0.0
        %225 = vmatpush1.msra.mxu0 0.0
        %226 = vmatprep.subr.mxu0 0.0
        %227 = vmatpush1.msra.mxu0 0.0
        %228 = vmatprep.subr.mxu0 0.0
        %229 = vmatpush1.msra.mxu0 0.0
        %230 = vmatprep.subr.mxu0 0.0
        %231 = vmatpush1.msra.mxu0 0.0
        %232 = vmatprep.subr.mxu0 0.0
        %233 = vmatpush1.msra.mxu0 0.0
        %234 = vmatprep.subr.mxu0 0.0
        %235 = vmatpush1.msra.mxu0 0.0
        %236 = vmatprep.subr.mxu0 0.0
        %237 = vmatpush1.msra.mxu0 %v199
        %238 = vmatprep.subr.mxu0 0.0
        %239 = vmatpush1.msra.mxu0 %v198
        %240 = vmatprep.subr.mxu0 0.0
        %241 = vmatpush1.msra.mxu0 %v197
        %242 = vmatprep.subr.mxu0 0.0
        %243 = vmatpush2.msra.mxu0 0.0
        %244 = vmatprep.subr.mxu0 0.0
        %245 = vmatpush2.msra.mxu0 0.0
        %246 = vmatprep.subr.mxu0 0.0
        %247 = vmatpush2.msra.mxu0 0.0
        %248 = vmatprep.subr.mxu0 0.0
        %249 = vmatpush2.msra.mxu0 0.0
        %250 = vmatprep.subr.mxu0 0.0
        %251 = vmatpush2.msra.mxu0 0.0
        %252 = vmatprep.subr.mxu0 0.0
        %253 = vmatpush2.msra.mxu0 0.0
        %254 = vmatprep.subr.mxu0 0.0
        %255 = vmatpush2.msra.mxu0 0.0
        %256 = vmatprep.subr.mxu0 0.0
        %257 = vmatpush2.msra.mxu0 0.0
        %258 = vmatprep.subr.mxu0 0.0
        %259 = vmatpush2.msra.mxu0 0.0
        %260 = vmatprep.subr.mxu0 0.0
        %261 = vmatpush2.msra.mxu0 0.0
        %262 = vmatprep.subr.mxu0 0.0
        %263 = vmatpush2.msra.mxu0 0.0
        %264 = vmatprep.subr.mxu0 0.0
        %265 = vmatpush2.msra.mxu0 0.0
        %266 = vmatprep.subr.mxu0 0.0
        %267 = vmatpush2.msra.mxu0 0.0
        %268 = vmatprep.subr.mxu0 0.0
        %269 = vmatpush2.msra.mxu0 0.0
        %270 = vmatprep.subr.mxu0 0.0
        %271 = vmatpush2.msra.mxu0 0.0
        %272 = vmatprep.subr.mxu0 0.0
        %273 = vmatpush2.msra.mxu0 0.0
        %274 = vmatprep.mubr.f32.mxu0 0.0
        %275 = vmatmul.mubr.f32.gmra.mxu0 %v202
        %v276 = vpop.f32.mrf.mxu0
        %v277 = vadd.f32 0.0, %v276
        %v278 = vpop.f32.mrf.mxu0
        %279 = vmatprep.mubr.f32.mxu0 0.0
        %280 = vmatmul.mubr.f32.gmra.mxu0 %v205
        %v281 = vpop.f32.mrf.mxu0
        %v282 = vadd.f32 0.0, %v281
        %v283 = vpop.f32.mrf.mxu0
        %284 = vmatprep.mubr.f32.mxu0 0.0
        %285 = vmatmul.mubr.f32.gmra.mxu0 %v208
        %v286 = vpop.f32.mrf.mxu0
        %v287 = vadd.f32 0.0, %v286
        %v288 = vpop.f32.mrf.mxu0
        %289 = vdwg.mxu0
        %290 = vst [vmem:[%s193] sm:$0xff] %v277
        %291 = vst [vmem:[%s193 + $0x8] sm:$0xff] %v282
        %292 = vst [vmem:[%s193 + $0x10] sm:$0xff] %v287
        %s293 = sand.u32 %s91, 1
        %s294 = scalar_lea.sflag [#allocation4], %s293
        %s295 = sand.u32 %s91, 1
        %s296 = smul.addr %s295, 24
        %s297 = scalar_lea.vmem [#allocation7], %s296
        // Predicated region
        $region37: #{tpu_custom_call.1} parent=27 // pred_check
          %p298 = pneg %p101
        $region38: #{tpu_custom_call.1} parent=27 // pred_check_branch
          %300 = sbr.rel (%p298) target = $region40
        $region39: #{tpu_custom_call.1} parent=27 // pred_region
          %s302 = ssub.s32 384, 384
          %303 = vsyncadd %s294, %s302
          %s304 = smul.addr %s24, 3
          %s305 = sadd.s32 %s25, %s304
          %s306 = smul.addr %s305, 128
          %s307 = scalar_lea.hbm %s2, %s306
          %s308 = sshll.u32 %s297, 4
          %s309 = int_to_ptr.vmem [resolvable:$true] %s308
          %314 = dma.vmem_to_hbm [thread:$0]  %s309, 384, %s307, %s294, 128, 128, 8
        $region40: #{tpu_custom_call.1} parent=27 // pred_fallthru
          _
      $region28: #{tpu_custom_call.1} parent=5 // pred_fallthru
        _
      %p315 = scmp.le.s32.totalorder 2, %s15
      // Predicated region
      $region41: #{tpu_custom_call.1} parent=5 // pred_check
        %p316 = pneg %p315
      $region42: #{tpu_custom_call.1} parent=5 // pred_check_branch
        %318 = sbr.rel (%p316) target = $region44
      $region43: #{tpu_custom_call.1} parent=5 // pred_region
        %s319 = ssub.s32 %s15, 2
        // Predicated region
        $region45: #{tpu_custom_call.1} parent=43 // pred_check
          %p320 = pneg %p107
        $region46: #{tpu_custom_call.1} parent=43 // pred_check_branch
          %322 = sbr.rel (%p320) target = $region48
        $region47: #{tpu_custom_call.1} parent=43 // pred_region
          %s323 = sand.u32 %s92, 1
          %s324 = scalar_lea.sflag [#allocation4], %s323
          %s325 = sand.u32 %s92, 1
          %s326 = smul.addr %s325, 24
          %s327 = scalar_lea.vmem [#allocation7], %s326
          %328 = dma.done %s324, 384
        $region48: #{tpu_custom_call.1} parent=43 // pred_fallthru
          _
      $region44: #{tpu_custom_call.1} parent=5 // pred_fallthru
        _
    $region6: #{tpu_custom_call.1} parent=1 // loop_footer
      %s19 = sadd.s32 1, %s15
    $region7: #{tpu_custom_call.1} parent=1 // loop_footer_branch
      %14 = sbr.rel target = $region3
    $region8: #{tpu_custom_call.1} parent=1 // loop_exit
      _
    %329 = vsyncpa [#allocation3], 1
    %s330 = scalar_lea.sflag [#allocation3], 1
    %331 = vsyncpa %s330, 1
    %332 = vsyncpa [#allocation6], 1
    %s333 = scalar_lea.sflag [#allocation6], 1
    %334 = vsyncpa %s333, 1
    %335 = vsyncpa [#allocation4], 1
    %s336 = scalar_lea.sflag [#allocation4], 1
    %337 = vsyncpa %s336, 1

</llo_original>
